<compile_context>
chip_gen: v6e
topology: v6e:2x2x1
jax: 0.10.0
libtpu: 0.0.40
codegen_flags: <defaults>
</compile_context>

<pallas_src>
import functools

import jax
import jax.numpy as jnp
from jax import lax
from jax.experimental import pallas as pl
from jax.experimental.pallas import tpu as pltpu

EPS = 1e-5
TARGET_BLOCK_BYTES = 6 * 1024 * 1024      # ~6 MiB per x / o block
VMEM_LIMIT_BYTES = 40 * 1024 * 1024       # > v5e/v6e scoped default, < v7x physical


# ---------------------------------------------------------------------------
# Tile-size helpers
# ---------------------------------------------------------------------------
def _pick_row_tile(rows, bytes_per_row, max_block_bytes):
    """Row-tile (sublane axis): multiple of 8, or full extent."""
    if rows <= 8:
        return rows
    t = min(rows, max(8, max_block_bytes // max(bytes_per_row, 1)))
    t = (t // 8) * 8
    if t >= rows:
        return rows
    return max(t, 8)


def _pick_lane_tile(m, bytes_per_col, max_block_bytes):
    """Lane-axis tile: multiple of 128, or full extent."""
    if m <= 128:
        return m
    t = min(m, max(128, max_block_bytes // max(bytes_per_col, 1)))
    t = (t // 128) * 128
    if t >= m:
        return m
    return max(t, 128)


# ---------------------------------------------------------------------------
# Fused kernel: channels-last (rows, C) layout
# ---------------------------------------------------------------------------
def _bn_rows_fused_kernel(x_ref, g_ref, b_ref, o_ref,
                          sum_ref, sq_ref, scale_ref, shift_ref,
                          *, n_rows, rows_d, tile_rows, c, dense_c):
    p = pl.program_id(0)              # 0 = stats pass, 1 = apply pass
    i = pl.program_id(1)              # row tile
    n_tiles = pl.num_programs(1)
    has_partial = (rows_d % tile_rows) != 0

    @pl.when(p == 0)
    def _stats():
        @pl.when(i == 0)
        def _init():
            sum_ref[...] = jnp.zeros_like(sum_ref)
            sq_ref[...] = jnp.zeros_like(sq_ref)

        x = x_ref[...].astype(jnp.float32)            # (tile_rows, dense_c)

        def _accum(xv):
            sum_ref[...] += jnp.sum(xv, axis=0, keepdims=True)
            sq_ref[...] += jnp.sum(xv * xv, axis=0, keepdims=True)

        if has_partial:
            # Mask padded rows only on the (single) partial last tile.
            @pl.when(i == n_tiles - 1)
            def _acc_last():
                rid = i * tile_rows + lax.broadcasted_iota(jnp.int32, x.shape, 0)
                _accum(jnp.where(rid < rows_d, x, 0.0))

            @pl.when(i != n_tiles - 1)
            def _acc_full():
                _accum(x)
        else:
            _accum(x)

        @pl.when(i == n_tiles - 1)
        def _finalize():
            s = sum_ref[...]
            q = sq_ref[...]
            # Fold the replicated lane groups (channel period = c) via XLU rolls;
            # result is the per-channel total replicated across all lanes.
            step = c
            while step < dense_c:
                s = s + pltpu.roll(s, shift=step, axis=1)
                q = q + pltpu.roll(q, shift=step, axis=1)
                step *= 2
            inv_n = jnp.float32(1.0 / n_rows)
            mean = s * inv_n
            var = jnp.maximum(q * inv_n - mean * mean, 0.0)      # biased variance
            scale = g_ref[...] * lax.rsqrt(var + EPS)
            scale_ref[...] = scale
            shift_ref[...] = b_ref[...] - mean * scale

    @pl.when(p == 1)
    def _apply():
        x = x_ref[...].astype(jnp.float32)
        o_ref[...] = (x * scale_ref[...] + shift_ref[...]).astype(o_ref.dtype)


def _bn_rows(x2d, gamma, beta, *, max_block_bytes=TARGET_BLOCK_BYTES):
    """Training-mode BatchNorm over the rows of a (rows, C) array (native dtype)."""
    rows, c = x2d.shape

    # Lane densification: view (rows, c) as (rows/g, 128) when possible.
    group = 1
    if c < 128 and 128 % c == 0 and rows % (128 // c) == 0:
        group = 128 // c
    rows_d = rows // group
    dense_c = c * group

    xd = x2d.reshape(rows_d, dense_c)
    g = jnp.tile(gamma.reshape(1, c).astype(jnp.float32), (1, group))
    b = jnp.tile(beta.reshape(1, c).astype(jnp.float32), (1, group))

    bytes_per_row = dense_c * xd.dtype.itemsize
    tile_rows = _pick_row_tile(rows_d, bytes_per_row, max_block_bytes)
    n_tiles = pl.cdiv(rows_d, tile_rows)

    x_spec = pl.BlockSpec((tile_rows, dense_c), lambda p, i: (i, 0))
    vec_spec = pl.BlockSpec((1, dense_c), lambda p, i: (0, 0))
    # Output stays pinned to block 0 during the stats pass -> no spurious writebacks.
    o_spec = pl.BlockSpec((tile_rows, dense_c), lambda p, i: (i * p, 0))

    kernel = functools.partial(
        _bn_rows_fused_kernel, n_rows=rows, rows_d=rows_d,
        tile_rows=tile_rows, c=c, dense_c=dense_c)

    yd = pl.pallas_call(
        kernel,
        out_shape=jax.ShapeDtypeStruct((rows_d, dense_c), x2d.dtype),
        grid_spec=pltpu.PrefetchScalarGridSpec(
            num_scalar_prefetch=0,
            grid=(2, n_tiles),
            in_specs=[x_spec, vec_spec, vec_spec],
            out_specs=o_spec,
            scratch_shapes=[pltpu.VMEM((1, dense_c), jnp.float32)] * 4),
        compiler_params=pltpu.CompilerParams(
            dimension_semantics=("arbitrary", "arbitrary"),
            vmem_limit_bytes=VMEM_LIMIT_BYTES),
        cost_estimate=pl.CostEstimate(
            flops=5 * rows * c, transcendentals=2 * c,
            bytes_accessed=xd.dtype.itemsize * 3 * rows * c),
    )(xd, g, b)
    return yd.reshape(rows, c)


# ---------------------------------------------------------------------------
# Fused kernel: channels-first (B, C, M) layout (no wrapper transposes)
# ---------------------------------------------------------------------------
def _bn_cf_fused_kernel(x_ref, g_ref, b_ref, o_ref,
                        sum_ref, sq_ref, scale_ref, shift_ref,
                        *, n_count, m, tile_m):
    p = pl.program_id(0)              # 0 = stats pass, 1 = apply pass
    bi = pl.program_id(1)             # batch index
    mi = pl.program_id(2)             # M tile
    n_b = pl.num_programs(1)
    n_m = pl.num_programs(2)
    has_partial = (m % tile_m) != 0

    @pl.when(p == 0)
    def _stats():
        @pl.when((bi == 0) & (mi == 0))
        def _init():
            sum_ref[...] = jnp.zeros_like(sum_ref)
            sq_ref[...] = jnp.zeros_like(sq_ref)

        x = x_ref[...].astype(jnp.float32)            # (C, tile_m)

        def _accum(xv):
            sum_ref[...] += jnp.sum(xv, axis=1, keepdims=True)
            sq_ref[...] += jnp.sum(xv * xv, axis=1, keepdims=True)

        if has_partial:
            @pl.when(mi == n_m - 1)
            def _acc_last():
                cid = mi * tile_m + lax.broadcasted_iota(jnp.int32, x.shape, 1)
                _accum(jnp.where(cid < m, x, 0.0))

            @pl.when(mi != n_m - 1)
            def _acc_full():
                _accum(x)
        else:
            _accum(x)

        @pl.when((bi == n_b - 1) & (mi == n_m - 1))
        def _finalize():
            inv_n = jnp.float32(1.0 / n_count)
            mean = sum_ref[...] * inv_n
            var = jnp.maximum(sq_ref[...] * inv_n - mean * mean, 0.0)
            scale = g_ref[...] * lax.rsqrt(var + EPS)
            scale_ref[...] = scale
            shift_ref[...] = b_ref[...] - mean * scale

    @pl.when(p == 1)
    def _apply():
        x = x_ref[...].astype(jnp.float32)
        o_ref[...] = (x * scale_ref[...] + shift_ref[...]).astype(o_ref.dtype)


def _bn_channels_first(x3d, gamma, beta, *, max_block_bytes=TARGET_BLOCK_BYTES):
    bsz, c, m = x3d.shape
    g = gamma.reshape(c, 1).astype(jnp.float32)
    b = beta.reshape(c, 1).astype(jnp.float32)

    bytes_per_col = c * x3d.dtype.itemsize
    tile_m = _pick_lane_tile(m, bytes_per_col, max_block_bytes)
    n_m = pl.cdiv(m, tile_m)

    x_spec = pl.BlockSpec((None, c, tile_m), lambda p, bi, mi: (bi, 0, mi))
    vec_spec = pl.BlockSpec((c, 1), lambda p, bi, mi: (0, 0))
    o_spec = pl.BlockSpec((None, c, tile_m), lambda p, bi, mi: (bi * p, 0, mi * p))

    kernel = functools.partial(_bn_cf_fused_kernel,
                               n_count=bsz * m, m=m, tile_m=tile_m)

    return pl.pallas_call(
        kernel,
        out_shape=jax.ShapeDtypeStruct((bsz, c, m), x3d.dtype),
        grid_spec=pltpu.PrefetchScalarGridSpec(
            num_scalar_prefetch=0,
            grid=(2, bsz, n_m),
            in_specs=[x_spec, vec_spec, vec_spec],
            out_specs=o_spec,
            scratch_shapes=[pltpu.VMEM((c, 1), jnp.float32)] * 4),
        compiler_params=pltpu.CompilerParams(
            dimension_semantics=("arbitrary", "arbitrary", "arbitrary"),
            vmem_limit_bytes=VMEM_LIMIT_BYTES),
        cost_estimate=pl.CostEstimate(
            flops=5 * bsz * c * m, transcendentals=2 * c,
            bytes_accessed=x3d.dtype.itemsize * 3 * bsz * c * m),
    )(x3d, g, b)


# ---------------------------------------------------------------------------
# Module forward
# ---------------------------------------------------------------------------
def batch_norm_forward(x, gamma, beta, feature_dim, *,
                       max_block_bytes=TARGET_BLOCK_BYTES):
    """Forward of the reference `BatchNorm` module (training-mode batch stats).
    Output dtype == input dtype; all statistics computed in float32."""
    if x.ndim == 3 and x.shape[-1] == feature_dim:
        # permute(0,2,1) -> BatchNorm1d -> permute(0,2,1): per-channel BN over all
        # B*M positions, channels last.
        bsz, m, c = x.shape
        y = _bn_rows(x.reshape(bsz * m, c), gamma, beta,
                     max_block_bytes=max_block_bytes)
        return y.reshape(bsz, m, c)
    if x.ndim == 3:
        # (B, C, M): nn.BatchNorm1d on 3-D input (channels = dim 1), native layout.
        return _bn_channels_first(x, gamma, beta, max_block_bytes=max_block_bytes)
    return _bn_rows(x, gamma, beta, max_block_bytes=max_block_bytes)
    # TODO(synk): running_mean / running_var buffer updates (training side effect
    # of nn.BatchNorm1d) are not modeled; they do not affect the forward output.


# ---------------------------------------------------------------------------
if __name__ == "__main__":
    key = jax.random.PRNGKey(0)
    k1, k2, k3, k4, k5, k6, k7 = jax.random.split(key, 7)

    feature_dim = 32
    gamma = 1.0 + 0.1 * jax.random.normal(k1, (feature_dim,), jnp.float32)
    beta = 0.1 * jax.random.normal(k2, (feature_dim,), jnp.float32)

    def reference(x):
        # PyTorch BatchNorm1d training-mode reference.
        if x.ndim == 3 and x.shape[-1] == feature_dim:
            flat = x.reshape(-1, feature_dim)
        elif x.ndim == 3:
            flat = jnp.transpose(x, (0, 2, 1)).reshape(-1, feature_dim)
        else:
            flat = x
        flat = flat.astype(jnp.float32)
        mean = jnp.mean(flat, axis=0, keepdims=True)
        var = jnp.mean((flat - mean) ** 2, axis=0, keepdims=True)
        y = (flat - mean) * lax.rsqrt(var + EPS) * gamma[None, :] + beta[None, :]
        if x.ndim == 3 and x.shape[-1] == feature_dim:
            return y.reshape(x.shape)
        if x.ndim == 3:
            bsz, c, m = x.shape
            return jnp.transpose(y.reshape(bsz, m, c), (0, 2, 1))
        return y

    # Case 1: (B, M, feature_dim) -- permute -> BN1d -> permute branch (lane-dense path).
    x3d = jax.random.normal(k3, (2, 16, feature_dim), jnp.float32)
    out3d = jax.block_until_ready(batch_norm_forward(x3d, gamma, beta, feature_dim))
    assert out3d.shape == x3d.shape
    assert bool(jnp.all(jnp.isfinite(out3d)))
    assert bool(jnp.allclose(out3d, reference(x3d), atol=2e-3, rtol=2e-3))

    # Case 2: (N, feature_dim) 2-D branch.
    x2d = jax.random.normal(k4, (8, feature_dim), jnp.float32)
    out2d = jax.block_until_ready(batch_norm_forward(x2d, gamma, beta, feature_dim))
    assert out2d.shape == x2d.shape
    assert bool(jnp.allclose(out2d, reference(x2d), atol=2e-3, rtol=2e-3))

    # Case 3: (B, feature_dim, M) channels-first branch (native kernel, no transposes).
    xcf = jax.random.normal(k5, (2, feature_dim, 48), jnp.float32)
    outcf = jax.block_until_ready(batch_norm_forward(xcf, gamma, beta, feature_dim))
    assert outcf.shape == xcf.shape
    assert bool(jnp.allclose(outcf, reference(xcf), atol=2e-3, rtol=2e-3))

    # Case 4: small block budget to exercise multi-tile grid + masked partial row tile.
    xbig = jax.random.normal(k6, (4, 300, feature_dim), jnp.float32)  # 1200 rows
    outbig = jax.block_until_ready(
        batch_norm_forward(xbig, gamma, beta, feature_dim, max_block_bytes=32 * 1024))
    assert outbig.shape == xbig.shape
    assert bool(jnp.allclose(outbig, reference(xbig), atol=2e-3, rtol=2e-3))

    # Case 5: channels-first multi-tile with masked partial M tile.
    xcf2 = jax.random.normal(k7, (2, feature_dim, 300), jnp.float32)
    outcf2 = jax.block_until_ready(
        batch_norm_forward(xcf2, gamma, beta, feature_dim, max_block_bytes=16 * 1024))
    assert outcf2.shape == xcf2.shape
    assert bool(jnp.allclose(outcf2, reference(xcf2), atol=2e-3, rtol=2e-3))

    # Case 6: native bf16 activations (no wrapper f32 cast; output stays bf16).
    xbf = jax.random.normal(k3, (2, 16, feature_dim), jnp.float32).astype(jnp.bfloat16)
    outbf = jax.block_until_ready(batch_norm_forward(xbf, gamma, beta, feature_dim))
    assert outbf.dtype == jnp.bfloat16
    assert bool(jnp.allclose(outbf.astype(jnp.float32),
                             reference(xbf.astype(jnp.float32)),
                             atol=5e-2, rtol=5e-2))

    print("KERNEL_OK")
</pallas_src>

<mosaic_0001>
module attributes {stable_mosaic.version = 11 : i64} {
  func.func @_bn_rows_fused_kernel(%arg0: i32, %arg1: i32, %arg2: memref<8x128xf32, #tpu.memory_space<vmem>>, %arg3: memref<1x128xf32, #tpu.memory_space<vmem>>, %arg4: memref<1x128xf32, #tpu.memory_space<vmem>>, %arg5: memref<8x128xf32, #tpu.memory_space<vmem>>, %arg6: memref<1x128xf32, #tpu.memory_space<vmem>>, %arg7: memref<1x128xf32, #tpu.memory_space<vmem>>, %arg8: memref<1x128xf32, #tpu.memory_space<vmem>>, %arg9: memref<1x128xf32, #tpu.memory_space<vmem>>) attributes {dimension_semantics = [#tpu.dimension_semantics<arbitrary>, #tpu.dimension_semantics<arbitrary>], iteration_bounds = array<i64: 2, 1>, scalar_prefetch = 0 : i64, scratch_operands = 4 : i64, tpu.core_type = #tpu.core_type<tc>, window_params = [{transform_indices = @transform_0, window_bounds = array<i64: 8, 128>}, {pipeline_mode = #tpu.pipeline_mode<synchronous>, transform_indices = @transform_1, window_bounds = array<i64: 1, 128>}, {pipeline_mode = #tpu.pipeline_mode<synchronous>, transform_indices = @transform_2, window_bounds = array<i64: 1, 128>}, {transform_indices = @transform_3, window_bounds = array<i64: 8, 128>}]} {
    %c0_i32 = arith.constant 0 : i32
    %0 = arith.cmpi eq, %arg0, %c0_i32 : i32
    %1 = arith.extui %0 : i1 to i32
    %c0_i32_0 = arith.constant 0 : i32
    %2 = arith.cmpi ne, %1, %c0_i32_0 : i32
    scf.if %2 {
      %c0_i32_2 = arith.constant 0 : i32
      %6 = arith.cmpi eq, %arg1, %c0_i32_2 : i32
      %7 = arith.extui %6 : i1 to i32
      %c0_i32_3 = arith.constant 0 : i32
      %8 = arith.cmpi ne, %7, %c0_i32_3 : i32
      scf.if %8 {
        %cst_16 = arith.constant 0.000000e+00 : f32
        %24 = vector.broadcast %cst_16 : f32 to vector<1x128xf32>
        %c0_17 = arith.constant 0 : index
        %c0_18 = arith.constant 0 : index
        %25 = vector.load %arg6[%c0_17, %c0_18] : memref<1x128xf32, #tpu.memory_space<vmem>>, vector<1x128xf32>
        tpu.vector_store %arg6[%c0_17, %c0_18], %24 {strides = array<i32>} : memref<1x128xf32, #tpu.memory_space<vmem>>, vector<1x128xf32>,
        %cst_19 = arith.constant 0.000000e+00 : f32
        %26 = vector.broadcast %cst_19 : f32 to vector<1x128xf32>
        %c0_20 = arith.constant 0 : index
        %c0_21 = arith.constant 0 : index
        %27 = vector.load %arg7[%c0_20, %c0_21] : memref<1x128xf32, #tpu.memory_space<vmem>>, vector<1x128xf32>
        tpu.vector_store %arg7[%c0_20, %c0_21], %26 {strides = array<i32>} : memref<1x128xf32, #tpu.memory_space<vmem>>, vector<1x128xf32>,
      } else {
      }
      %c0 = arith.constant 0 : index
      %c0_4 = arith.constant 0 : index
      %9 = vector.load %arg2[%c0, %c0_4] : memref<8x128xf32, #tpu.memory_space<vmem>>, vector<8x128xf32>
      %c0_5 = arith.constant 0 : index
      %c0_6 = arith.constant 0 : index
      %10 = vector.load %arg6[%c0_5, %c0_6] : memref<1x128xf32, #tpu.memory_space<vmem>>, vector<1x128xf32>
      %cst = arith.constant dense<0.000000e+00> : vector<128xf32>
      %11 = vector.multi_reduction <add>, %9, %cst [0] : vector<8x128xf32> to vector<128xf32>
      %12 = vector.shape_cast %11 : vector<128xf32> to vector<1x128xf32>
      %13 = arith.addf %10, %12 : vector<1x128xf32>
      %c0_7 = arith.constant 0 : index
      %c0_8 = arith.constant 0 : index
      %14 = vector.load %arg6[%c0_7, %c0_8] : memref<1x128xf32, #tpu.memory_space<vmem>>, vector<1x128xf32>
      tpu.vector_store %arg6[%c0_7, %c0_8], %13 {strides = array<i32>} : memref<1x128xf32, #tpu.memory_space<vmem>>, vector<1x128xf32>,
      %c0_9 = arith.constant 0 : index
      %c0_10 = arith.constant 0 : index
      %15 = vector.load %arg7[%c0_9, %c0_10] : memref<1x128xf32, #tpu.memory_space<vmem>>, vector<1x128xf32>
      %16 = arith.mulf %9, %9 : vector<8x128xf32>
      %cst_11 = arith.constant dense<0.000000e+00> : vector<128xf32>
      %17 = vector.multi_reduction <add>, %16, %cst_11 [0] : vector<8x128xf32> to vector<128xf32>
      %18 = vector.shape_cast %17 : vector<128xf32> to vector<1x128xf32>
      %19 = arith.addf %15, %18 : vector<1x128xf32>
      %c0_12 = arith.constant 0 : index
      %c0_13 = arith.constant 0 : index
      %20 = vector.load %arg7[%c0_12, %c0_13] : memref<1x128xf32, #tpu.memory_space<vmem>>, vector<1x128xf32>
      tpu.vector_store %arg7[%c0_12, %c0_13], %19 {strides = array<i32>} : memref<1x128xf32, #tpu.memory_space<vmem>>, vector<1x128xf32>,
      %c0_i32_14 = arith.constant 0 : i32
      %21 = arith.cmpi eq, %arg1, %c0_i32_14 : i32
      %22 = arith.extui %21 : i1 to i32
      %c0_i32_15 = arith.constant 0 : i32
      %23 = arith.cmpi ne, %22, %c0_i32_15 : i32
      scf.if %23 {
        %c0_16 = arith.constant 0 : index
        %c0_17 = arith.constant 0 : index
        %24 = vector.load %arg6[%c0_16, %c0_17] : memref<1x128xf32, #tpu.memory_space<vmem>>, vector<1x128xf32>
        %c0_18 = arith.constant 0 : index
        %c0_19 = arith.constant 0 : index
        %25 = vector.load %arg7[%c0_18, %c0_19] : memref<1x128xf32, #tpu.memory_space<vmem>>, vector<1x128xf32>
        %c32_i32 = arith.constant 32 : i32
        %26 = tpu.dynamic_rotate %24 by %c32_i32 dim 1 : vector<1x128xf32>, i32 -> vector<1x128xf32>
        %27 = arith.addf %24, %26 : vector<1x128xf32>
        %c32_i32_20 = arith.constant 32 : i32
        %28 = tpu.dynamic_rotate %25 by %c32_i32_20 dim 1 : vector<1x128xf32>, i32 -> vector<1x128xf32>
        %29 = arith.addf %25, %28 : vector<1x128xf32>
        %c64_i32 = arith.constant 64 : i32
        %30 = tpu.dynamic_rotate %27 by %c64_i32 dim 1 : vector<1x128xf32>, i32 -> vector<1x128xf32>
        %31 = arith.addf %27, %30 : vector<1x128xf32>
        %c64_i32_21 = arith.constant 64 : i32
        %32 = tpu.dynamic_rotate %29 by %c64_i32_21 dim 1 : vector<1x128xf32>, i32 -> vector<1x128xf32>
        %33 = arith.addf %29, %32 : vector<1x128xf32>
        %cst_22 = arith.constant 3.125000e-02 : f32
        %34 = vector.broadcast %cst_22 : f32 to vector<1x128xf32>
        %35 = arith.mulf %31, %34 : vector<1x128xf32>
        %cst_23 = arith.constant 3.125000e-02 : f32
        %36 = vector.broadcast %cst_23 : f32 to vector<1x128xf32>
        %37 = arith.mulf %33, %36 : vector<1x128xf32>
        %38 = arith.mulf %35, %35 : vector<1x128xf32>
        %39 = arith.subf %37, %38 : vector<1x128xf32>
        %cst_24 = arith.constant 0.000000e+00 : f32
        %40 = vector.broadcast %cst_24 : f32 to vector<1x128xf32>
        %41 = arith.maximumf %39, %40 : vector<1x128xf32>
        %c0_25 = arith.constant 0 : index
        %c0_26 = arith.constant 0 : index
        %42 = vector.load %arg3[%c0_25, %c0_26] : memref<1x128xf32, #tpu.memory_space<vmem>>, vector<1x128xf32>
        %cst_27 = arith.constant 9.99999974E-6 : f32
        %43 = vector.broadcast %cst_27 : f32 to vector<1x128xf32>
        %44 = arith.addf %41, %43 : vector<1x128xf32>
        %45 = math.rsqrt %44 : vector<1x128xf32>
        %46 = arith.mulf %42, %45 : vector<1x128xf32>
        %c0_28 = arith.constant 0 : index
        %c0_29 = arith.constant 0 : index
        %47 = vector.load %arg8[%c0_28, %c0_29] : memref<1x128xf32, #tpu.memory_space<vmem>>, vector<1x128xf32>
        tpu.vector_store %arg8[%c0_28, %c0_29], %46 {strides = array<i32>} : memref<1x128xf32, #tpu.memory_space<vmem>>, vector<1x128xf32>,
        %c0_30 = arith.constant 0 : index
        %c0_31 = arith.constant 0 : index
        %48 = vector.load %arg4[%c0_30, %c0_31] : memref<1x128xf32, #tpu.memory_space<vmem>>, vector<1x128xf32>
        %49 = arith.mulf %35, %46 : vector<1x128xf32>
        %50 = arith.subf %48, %49 : vector<1x128xf32>
        %c0_32 = arith.constant 0 : index
        %c0_33 = arith.constant 0 : index
        %51 = vector.load %arg9[%c0_32, %c0_33] : memref<1x128xf32, #tpu.memory_space<vmem>>, vector<1x128xf32>
        tpu.vector_store %arg9[%c0_32, %c0_33], %50 {strides = array<i32>} : memref<1x128xf32, #tpu.memory_space<vmem>>, vector<1x128xf32>,
      } else {
      }
    } else {
    }
    %c1_i32 = arith.constant 1 : i32
    %3 = arith.cmpi eq, %arg0, %c1_i32 : i32
    %4 = arith.extui %3 : i1 to i32
    %c0_i32_1 = arith.constant 0 : i32
    %5 = arith.cmpi ne, %4, %c0_i32_1 : i32
    scf.if %5 {
      %c0 = arith.constant 0 : index
      %c0_2 = arith.constant 0 : index
      %6 = vector.load %arg2[%c0, %c0_2] : memref<8x128xf32, #tpu.memory_space<vmem>>, vector<8x128xf32>
      %c0_3 = arith.constant 0 : index
      %c0_4 = arith.constant 0 : index
      %7 = vector.load %arg8[%c0_3, %c0_4] : memref<1x128xf32, #tpu.memory_space<vmem>>, vector<1x128xf32>
      %8 = vector.broadcast %7 : vector<1x128xf32> to vector<8x128xf32>
      %9 = arith.mulf %6, %8 : vector<8x128xf32>
      %c0_5 = arith.constant 0 : index
      %c0_6 = arith.constant 0 : index
      %10 = vector.load %arg9[%c0_5, %c0_6] : memref<1x128xf32, #tpu.memory_space<vmem>>, vector<1x128xf32>
      %11 = vector.broadcast %10 : vector<1x128xf32> to vector<8x128xf32>
      %12 = arith.addf %9, %11 : vector<8x128xf32>
      %c0_7 = arith.constant 0 : index
      %c0_8 = arith.constant 0 : index
      %13 = vector.load %arg5[%c0_7, %c0_8] : memref<8x128xf32, #tpu.memory_space<vmem>>, vector<8x128xf32>
      tpu.vector_store %arg5[%c0_7, %c0_8], %12 {strides = array<i32>} : memref<8x128xf32, #tpu.memory_space<vmem>>, vector<8x128xf32>,
    } else {
    }
    return
  }
  func.func @transform_0(%arg0: i32, %arg1: i32) -> (i32, i32) {
    %c0_i32 = arith.constant 0 : i32
    %c0_i32_0 = arith.constant 0 : i32
    return %arg1, %c0_i32 : i32, i32
  }
  func.func @transform_1(%arg0: i32, %arg1: i32) -> (i32, i32) {
    %c0_i32 = arith.constant 0 : i32
    %c0_i32_0 = arith.constant 0 : i32
    %c0_i32_1 = arith.constant 0 : i32
    return %c0_i32, %c0_i32_0 : i32, i32
  }
  func.func @transform_2(%arg0: i32, %arg1: i32) -> (i32, i32) {
    %c0_i32 = arith.constant 0 : i32
    %c0_i32_0 = arith.constant 0 : i32
    %c0_i32_1 = arith.constant 0 : i32
    return %c0_i32, %c0_i32_0 : i32, i32
  }
  func.func @transform_3(%arg0: i32, %arg1: i32) -> (i32, i32) {
    %0 = arith.muli %arg1, %arg0 : i32
    %c0_i32 = arith.constant 0 : i32
    %c0_i32_0 = arith.constant 0 : i32
    return %0, %c0_i32 : i32, i32
  }
}

</mosaic_0001>

<llo_original>
// kernel: tpu_custom_call.1
$region0: #{tpu_custom_call.1}
  #allocation0 [shape = 'u32[]', space=smem, size = 0x4, offset = 0x4, fixed_abs, tag = 'smem constant byte address 0x4 - core index']
  #allocation1 [shape = 'u32[144,128]{1,0:T(1,128)}', space=vmem, size = 0x12000, scoped, tag = 'internal scratch']
  #allocation2 [shape = 'f32[1,128]{1,0:T(1,128)}', space=vmem, size = 0x200, scoped, tag = 'scratch operand']
  #allocation3 [shape = 'f32[1,128]{1,0:T(1,128)}', space=vmem, size = 0x200, scoped, tag = 'scratch operand']
  #allocation4 [shape = 'f32[1,128]{1,0:T(1,128)}', space=vmem, size = 0x200, scoped, tag = 'scratch operand']
  #allocation5 [shape = 'f32[1,128]{1,0:T(1,128)}', space=vmem, size = 0x200, scoped, tag = 'scratch operand']
  %s0 = inlined_call_operand.hbm [shape: f32[8,128], index: 0, kind: input, shape index: {}]
  %s1 = inlined_call_operand.vmem [shape: f32[1,128], index: 1, kind: input, shape index: {}]
  %s2 = inlined_call_operand.vmem [shape: f32[1,128], index: 2, kind: input, shape index: {}]
  %s3 = inlined_call_operand.hbm [shape: f32[8,128], index: 3, kind: output, shape index: {}]
  %s4 = sld [smem:[#allocation0]]
  $region65: #{tpu_custom_call.1} parent=0
    _
  %s6 = ssub.s32 1, %s4
  %s7 = scalar_select 0, %s6, %s4
  $region1: #{tpu_custom_call.1} parent=0
    #allocation6 [shape = 'u8[4096]{0}', space=vmem, size = 0x1000, scoped, tag = 'input window, operand 0, single buffered']
    #allocation7 [shape = 's32[2]{0}', space=sflag, size = 0x8, scoped, tag = 'scoped memory for tpu_custom_call.1']
    #allocation8 [shape = 's32[2]{0}', space=sflag, size = 0x8, scoped, tag = 'scoped memory for tpu_custom_call.1']
    #allocation9 [shape = 'u8[8192]{0}', space=vmem, size = 0x2000, scoped, tag = 'output window, operand 0']
    %8 = vsyncpa [#allocation7], 0
    %9 = vsyncpa [#allocation8], 0
    %s10 = scalar_lea.sflag [#allocation8], 1
    %11 = vsyncpa %s10, 0
    loop: start=0, step=1, limit=4
    $region2: #{tpu_custom_call.1} parent=1 // loop_pre_header
      _
    $region3: #{tpu_custom_call.1} parent=1 // loop_header
      %s13 = sphi 0, %s17
      %p14 = scmp.ge.s32.totalorder %s13, 4
      %s20 = sphi 0, %s32
      %s21 = sphi 0, %s28
      %s22 = sphi 0, %s20
      %s23 = sphi 0, %s21
      %s24 = sphi 0, %s22
      %s25 = sphi 0, %s23
      %s35 = sphi 0, %s37
      %s38 = sphi 0, %s35
      %s39 = sphi 0, %s38
      %s55 = sphi 0, %s39
      %s59 = sphi 0, %s59
      %s61 = sphi 0, %s59
      %s62 = sphi 0, %s61
      %s76 = sphi 0, %s62
      %s80 = sphi 0, %s80
      %s82 = sphi 0, %s80
      %s83 = sphi 0, %s82
      %s97 = sphi 0, %s83
      %s105 = sphi 0, %s107
      %s108 = sphi 0, %s105
      %s109 = sphi 0, %s108
      %s125 = sphi 0, %s109
    $region4: #{tpu_custom_call.1} parent=1 // loop_header_branch
      %16 = sbr.rel (%p14) target = $region8
    $region5: #{tpu_custom_call.1} parent=1 // loop_body
      %s18 = ssub.s32 %s13, 1
      %s19 = ssub.s32 %s13, 2
      %s26 = sadd.s32 1, %s21
      %p27 = scmp.ge.s32.totalorder %s26, 1
      %s28 = scalar_select %p27, 0, %s26
      %s29 = sadd.s32 1, %s20
      %s30 = scalar_select %p27, %s29, %s20
      %p31 = scmp.ge.s32.totalorder %s30, 2
      %s32 = scalar_select %p31, 0, %s30
      %s33 = ssub.s32 %s21, %s28
      %p34 = scmp.eq.s32.totalorder %s33, 0
      %s36 = sadd.s32 %s35, 1
      %s37 = scalar_select %p34, %s35, %s36
      %p40 = pneg %p34
      %p41 = scmp.eq.s32.totalorder %s13, 1
      %p42 = por %p40, %p41
      %p43 = scmp.ne.s32.totalorder %s35, %s38
      %p44 = scmp.eq.s32.totalorder %s13, 0
      %p45 = por %p43, %p44
      %p46 = scmp.ne.s32.totalorder %s35, %s38
      %p47 = scmp.eq.s32.totalorder %s18, 1
      %p48 = por %p46, %p47
      %p49 = scmp.ne.s32.totalorder %s38, %s39
      %p50 = scmp.eq.s32.totalorder %s18, 0
      %p51 = por %p49, %p50
      %p52 = scmp.ne.s32.totalorder %s38, %s39
      %p53 = scmp.eq.s32.totalorder %s19, 1
      %p54 = por %p52, %p53
      %p56 = scmp.ne.s32.totalorder %s39, %s55
      %p57 = scmp.eq.s32.totalorder %s19, 0
      %p58 = por %p56, %p57
      %s60 = sadd.s32 %s59, 1
      %p63 = scmp.eq.s32.totalorder %s13, 1
      %p64 = scmp.ne.s32.totalorder %s59, %s61
      %p65 = scmp.eq.s32.totalorder %s13, 0
      %p66 = por %p64, %p65
      %p67 = scmp.ne.s32.totalorder %s59, %s61
      %p68 = scmp.eq.s32.totalorder %s18, 1
      %p69 = por %p67, %p68
      %p70 = scmp.ne.s32.totalorder %s61, %s62
      %p71 = scmp.eq.s32.totalorder %s18, 0
      %p72 = por %p70, %p71
      %p73 = scmp.ne.s32.totalorder %s61, %s62
      %p74 = scmp.eq.s32.totalorder %s19, 1
      %p75 = por %p73, %p74
      %p77 = scmp.ne.s32.totalorder %s62, %s76
      %p78 = scmp.eq.s32.totalorder %s19, 0
      %p79 = por %p77, %p78
      %s81 = sadd.s32 %s80, 1
      %p84 = scmp.eq.s32.totalorder %s13, 1
      %p85 = scmp.ne.s32.totalorder %s80, %s82
      %p86 = scmp.eq.s32.totalorder %s13, 0
      %p87 = por %p85, %p86
      %p88 = scmp.ne.s32.totalorder %s80, %s82
      %p89 = scmp.eq.s32.totalorder %s18, 1
      %p90 = por %p88, %p89
      %p91 = scmp.ne.s32.totalorder %s82, %s83
      %p92 = scmp.eq.s32.totalorder %s18, 0
      %p93 = por %p91, %p92
      %p94 = scmp.ne.s32.totalorder %s82, %s83
      %p95 = scmp.eq.s32.totalorder %s19, 1
      %p96 = por %p94, %p95
      %p98 = scmp.ne.s32.totalorder %s83, %s97
      %p99 = scmp.eq.s32.totalorder %s19, 0
      %p100 = por %p98, %p99
      %s101 = smul.u32 %s21, %s20
      %s102 = smul.u32 %s28, %s32
      %s103 = ssub.s32 %s101, %s102
      %p104 = scmp.eq.s32.totalorder %s103, 0
      %s106 = sadd.s32 %s105, 1
      %s107 = scalar_select %p104, %s105, %s106
      %p110 = pneg %p104
      %p111 = scmp.eq.s32.totalorder %s13, 1
      %p112 = por %p110, %p111
      %p113 = scmp.ne.s32.totalorder %s105, %s108
      %p114 = scmp.eq.s32.totalorder %s13, 0
      %p115 = por %p113, %p114
      %p116 = scmp.ne.s32.totalorder %s105, %s108
      %p117 = scmp.eq.s32.totalorder %s18, 1
      %p118 = por %p116, %p117
      %p119 = scmp.ne.s32.totalorder %s108, %s109
      %p120 = scmp.eq.s32.totalorder %s18, 0
      %p121 = por %p119, %p120
      %p122 = scmp.ne.s32.totalorder %s108, %s109
      %p123 = scmp.eq.s32.totalorder %s19, 1
      %p124 = por %p122, %p123
      %p126 = scmp.ne.s32.totalorder %s109, %s125
      %p127 = scmp.eq.s32.totalorder %s19, 0
      %p128 = por %p126, %p127
      %p129 = scmp.le.s32.totalorder 1, %s13
      %p130 = scmp.lt.s32.totalorder %s13, 3
      %p131 = pnand %p129, %p130
      %p132 = pneg %p131
      // Predicated region
      $region9: #{tpu_custom_call.1} parent=5 // pred_check
        _
      $region10: #{tpu_custom_call.1} parent=5 // pred_check_branch
        %134 = sbr.rel (%p131) target = $region12
      $region11: #{tpu_custom_call.1} parent=5 // pred_region
        %s135 = ssub.s32 %s13, 1
        // Predicated region
        $region13: #{tpu_custom_call.1} parent=11 // pred_check
          %p136 = pneg %p51
        $region14: #{tpu_custom_call.1} parent=11 // pred_check_branch
          %138 = sbr.rel (%p136) target = $region16
        $region15: #{tpu_custom_call.1} parent=11 // pred_region
          %s140 = ssub.s32 128, 128
          %141 = vsyncadd [#allocation7], %s140
          %s142 = smul.addr %s23, 128
          %s143 = scalar_lea.hbm %s0, %s142
          %s145 = sshll.u32 [#allocation6], 4
          %s146 = int_to_ptr.vmem [resolvable:$true] %s145
          %148 = dma.hbm_to_vmem [thread:$0]  %s143, 128, %s146, [#allocation7]
        $region16: #{tpu_custom_call.1} parent=11 // pred_fallthru
          _
        // Predicated region
        $region17: #{tpu_custom_call.1} parent=11 // pred_check
          %p149 = pneg %p72
        $region18: #{tpu_custom_call.1} parent=11 // pred_check_branch
          %151 = sbr.rel (%p149) target = $region20
        $region19: #{tpu_custom_call.1} parent=11 // pred_region
          _
        $region20: #{tpu_custom_call.1} parent=11 // pred_fallthru
          _
        // Predicated region
        $region21: #{tpu_custom_call.1} parent=11 // pred_check
          %p152 = pneg %p93
        $region22: #{tpu_custom_call.1} parent=11 // pred_check_branch
          %154 = sbr.rel (%p152) target = $region24
        $region23: #{tpu_custom_call.1} parent=11 // pred_region
          _
        $region24: #{tpu_custom_call.1} parent=11 // pred_fallthru
          _
      $region12: #{tpu_custom_call.1} parent=5 // pred_fallthru
        _
      %p155 = scmp.lt.s32.totalorder %s13, 2
      // Predicated region
      $region25: #{tpu_custom_call.1} parent=5 // pred_check
        %p156 = pneg %p155
      $region26: #{tpu_custom_call.1} parent=5 // pred_check_branch
        %158 = sbr.rel (%p156) target = $region28
      $region27: #{tpu_custom_call.1} parent=5 // pred_region
        _
      $region28: #{tpu_custom_call.1} parent=5 // pred_fallthru
        _
      %p159 = scmp.le.s32.totalorder 1, %s13
      %p160 = scmp.lt.s32.totalorder %s13, 3
      %p161 = pnand %p159, %p160
      %p162 = pneg %p161
      // Predicated region
      $region29: #{tpu_custom_call.1} parent=5 // pred_check
        _
      $region30: #{tpu_custom_call.1} parent=5 // pred_check_branch
        %164 = sbr.rel (%p161) target = $region32
      $region31: #{tpu_custom_call.1} parent=5 // pred_region
        %s165 = ssub.s32 %s13, 1
        // Predicated region
        $region33: #{tpu_custom_call.1} parent=31 // pred_check
          %p166 = pneg %p51
        $region34: #{tpu_custom_call.1} parent=31 // pred_check_branch
          %168 = sbr.rel (%p166) target = $region36
        $region35: #{tpu_custom_call.1} parent=31 // pred_region
          %169 = dma.done [#allocation7], 128
        $region36: #{tpu_custom_call.1} parent=31 // pred_fallthru
          _
        %p170 = pneg %p51
        %p171 = pneg %p48
        %p172 = pneg %p72
        %p173 = pneg %p69
        %p174 = pneg %p93
        %p175 = pneg %p90
        %p176 = pneg %p121
        %p177 = pneg %p118
        %s178 = sand.u32 %s108, 1
        %s179 = scalar_lea.sflag [#allocation8], %s178
        %s180 = sand.u32 %s108, 1
        %s181 = smul.addr %s180, 8
        %s182 = scalar_lea.vmem [#allocation9], %s181
        %s183 = smul.u32 %s23, %s22
        %p184 = scmp.eq.s32.totalorder %s22, 0
        // Predicated region
        $region37: #{tpu_custom_call.1} parent=31 // pred_check
          %p185 = pneg %p184
        $region38: #{tpu_custom_call.1} parent=31 // pred_check_branch
          %187 = sbr.rel (%p185) target = $region40
        $region39: #{tpu_custom_call.1} parent=31 // pred_region
          %p188 = scmp.eq.s32.totalorder %s23, 0
          // Predicated region
          $region41: #{tpu_custom_call.1} parent=39 // pred_check
            %p189 = pneg %p188
          $region42: #{tpu_custom_call.1} parent=39 // pred_check_branch
            %191 = sbr.rel (%p189) target = $region44
          $region43: #{tpu_custom_call.1} parent=39 // pred_region
            %192 = vst [vmem:[#allocation2] sm:$0x1] 0.0
            %193 = vst [vmem:[#allocation3] sm:$0x1] 0.0
          $region44: #{tpu_custom_call.1} parent=39 // pred_fallthru
            _
          %v194 = vld [vmem:[#allocation6] sm:$0xff]
          %v195 = vld [vmem:[#allocation2] sm:$0x1]
          %v196 = vrot.slane %v194, 4
          %v197 = vadd.f32 %v194, %v196
          %v198 = vrot.slane %v197, 2
          %v199 = vadd.f32 %v197, %v198
          %v200 = vrot.slane %v199, 1
          %v201 = vadd.f32 %v199, %v200
          %v202 = vadd.f32 %v195, %v201
          %203 = vst [vmem:[#allocation2] sm:$0x1] %v202
          %v204 = vld [vmem:[#allocation3] sm:$0x1]
          %v205 = vmul.f32 %v194, %v194
          %v206 = vrot.slane %v205, 4
          %v207 = vadd.f32 %v205, %v206
          %v208 = vrot.slane %v207, 2
          %v209 = vadd.f32 %v207, %v208
          %v210 = vrot.slane %v209, 1
          %v211 = vadd.f32 %v209, %v210
          %v212 = vadd.f32 %v204, %v211
          %213 = vst [vmem:[#allocation3] sm:$0x1] %v212
          // Predicated region
          $region45: #{tpu_custom_call.1} parent=39 // pred_check
            %p214 = pneg %p188
          $region46: #{tpu_custom_call.1} parent=39 // pred_check_branch
            %216 = sbr.rel (%p214) target = $region48
          $region47: #{tpu_custom_call.1} parent=39 // pred_region
            %v217 = vld [vmem:[#allocation2] sm:$0x1]
            %v218 = vld [vmem:[#allocation3] sm:$0x1]
            %219 = vrot.lane.b32.xlu0 %v217, 32
            %v220 = vpop.permute.xlu0 %219
            %v221 = vadd.f32 %v217, %v220
            %222 = vrot.lane.b32.xlu0 %v218, 32
            %v223 = vpop.permute.xlu0 %222
            %v224 = vadd.f32 %v218, %v223
            %225 = vrot.lane.b32.xlu0 %v221, 64
            %v226 = vpop.permute.xlu0 %225
            %v227 = vadd.f32 %v221, %v226
            %228 = vrot.lane.b32.xlu0 %v224, 64
            %v229 = vpop.permute.xlu0 %228
            %v230 = vadd.f32 %v224, %v229
            %v231 = vmul.f32 %v227, 0.03125
            %v232 = vmul.f32 %v230, 0.03125
            %v233 = vmul.f32 %v231, %v231
            %v234 = vsub.f32 %v232, %v233
            %v235 = vmax.f32 %v234, 0.0
            %v236 = vld [vmem:[%s1] sm:$0x1]
            %v237 = vadd.f32 %v235, 1e-05
            %v238 = vrsqrt.pop %v237
            %v239 = vmul.f32 %v236, %v238
            %240 = vst [vmem:[#allocation4] sm:$0x1] %v239
            %v241 = vld [vmem:[%s2] sm:$0x1]
            %v242 = vmul.f32 %v231, %v239
            %v243 = vsub.f32 %v241, %v242
            %244 = vst [vmem:[#allocation5] sm:$0x1] %v243
          $region48: #{tpu_custom_call.1} parent=39 // pred_fallthru
            _
        $region40: #{tpu_custom_call.1} parent=31 // pred_fallthru
          _
        %p245 = scmp.eq.s32.totalorder %s22, 1
        // Predicated region
        $region49: #{tpu_custom_call.1} parent=31 // pred_check
          %p246 = pneg %p245
        $region50: #{tpu_custom_call.1} parent=31 // pred_check_branch
          %248 = sbr.rel (%p246) target = $region52
        $region51: #{tpu_custom_call.1} parent=31 // pred_region
          %v249 = vld [vmem:[#allocation6] sm:$0xff]
          %v250 = vld [vmem:[#allocation4] sm:$0x1]
          %v252 = vlaneseq
          %v253 = vshrl.u32 %v252, 7
          %v254 = vsub.s32 0, %v253
          %v255 = vrot.slane %v250, %v254
          %v257 = vmul.f32 %v249, %v255
          %v258 = vld [vmem:[#allocation5] sm:$0x1]
          %v260 = vlaneseq
          %v261 = vshrl.u32 %v260, 7
          %v262 = vsub.s32 0, %v261
          %v263 = vrot.slane %v258, %v262
          %v265 = vadd.f32 %v257, %v263
          %266 = vst [vmem:[%s182] sm:$0xff] %v265
        $region52: #{tpu_custom_call.1} parent=31 // pred_fallthru
          _
        %s267 = sand.u32 %s108, 1
        %s268 = scalar_lea.sflag [#allocation8], %s267
        %s269 = sand.u32 %s108, 1
        %s270 = smul.addr %s269, 8
        %s271 = scalar_lea.vmem [#allocation9], %s270
        // Predicated region
        $region53: #{tpu_custom_call.1} parent=31 // pred_check
          %p272 = pneg %p118
        $region54: #{tpu_custom_call.1} parent=31 // pred_check_branch
          %274 = sbr.rel (%p272) target = $region56
        $region55: #{tpu_custom_call.1} parent=31 // pred_region
          %s275 = smul.u32 %s23, %s22
          %s277 = ssub.s32 128, 128
          %278 = vsyncadd %s268, %s277
          %s279 = smul.addr %s275, 128
          %s280 = scalar_lea.hbm %s3, %s279
          %s282 = sshll.u32 %s271, 4
          %s283 = int_to_ptr.vmem [resolvable:$true] %s282
          %285 = dma.vmem_to_hbm [thread:$0]  %s283, 128, %s280, %s268
        $region56: #{tpu_custom_call.1} parent=31 // pred_fallthru
          _
      $region32: #{tpu_custom_call.1} parent=5 // pred_fallthru
        _
      %p286 = scmp.le.s32.totalorder 2, %s13
      // Predicated region
      $region57: #{tpu_custom_call.1} parent=5 // pred_check
        %p287 = pneg %p286
      $region58: #{tpu_custom_call.1} parent=5 // pred_check_branch
        %289 = sbr.rel (%p287) target = $region60
      $region59: #{tpu_custom_call.1} parent=5 // pred_region
        %s290 = ssub.s32 %s13, 2
        // Predicated region
        $region61: #{tpu_custom_call.1} parent=59 // pred_check
          %p291 = pneg %p124
        $region62: #{tpu_custom_call.1} parent=59 // pred_check_branch
          %293 = sbr.rel (%p291) target = $region64
        $region63: #{tpu_custom_call.1} parent=59 // pred_region
          %s294 = sand.u32 %s109, 1
          %s295 = scalar_lea.sflag [#allocation8], %s294
          %s296 = sand.u32 %s109, 1
          %s297 = smul.addr %s296, 8
          %s298 = scalar_lea.vmem [#allocation9], %s297
          %299 = dma.done %s295, 128
        $region64: #{tpu_custom_call.1} parent=59 // pred_fallthru
          _
      $region60: #{tpu_custom_call.1} parent=5 // pred_fallthru
        _
    $region6: #{tpu_custom_call.1} parent=1 // loop_footer
      %s17 = sadd.s32 1, %s13
    $region7: #{tpu_custom_call.1} parent=1 // loop_footer_branch
      %12 = sbr.rel target = $region3
    $region8: #{tpu_custom_call.1} parent=1 // loop_exit
      _
    %300 = vsyncpa [#allocation7], 1
    %s301 = scalar_lea.sflag [#allocation7], 1
    %302 = vsyncpa %s301, 1
    %303 = vsyncpa [#allocation8], 1
    %s304 = scalar_lea.sflag [#allocation8], 1
    %305 = vsyncpa %s304, 1

</llo_original>
